<compile_context>
chip_gen: v7x
topology: tpu7x:2x2x1
jax: 0.10.0
libtpu: 0.0.40
codegen_flags: <defaults>
</compile_context>

<pallas_src>
import jax
import jax.numpy as jnp
from jax.experimental import pallas as pl
from jax.experimental.pallas import tpu as pltpu


def _round_up(n: int, m: int) -> int:
    return ((n + m - 1) // m) * m


# --------------------------------------------------------------------------
# Kernels
# --------------------------------------------------------------------------
def _mlp_eval_kernel(x_ref, w1_ref, b1_ref, w2_ref, b2_ref, o_ref):
    # (TB, D1) @ (D1, Hp) -> f32 accumulate, bias add in f32.
    h = jnp.dot(x_ref[...], w1_ref[...], preferred_element_type=jnp.float32)
    h = h + b1_ref[...]
    # (TB, Hp) @ (Hp, Hp)
    y = jnp.dot(h.astype(w2_ref.dtype), w2_ref[...],
                preferred_element_type=jnp.float32)
    y = y + b2_ref[...]
    o_ref[...] = y.astype(o_ref.dtype)


def _mlp_train_kernel(x_ref, mask_ref, w1_ref, b1_ref, w2_ref, b2_ref, o_ref):
    h = jnp.dot(x_ref[...], w1_ref[...], preferred_element_type=jnp.float32)
    h = h + b1_ref[...]
    # Dropout: mask already holds {0, 1/(1-p)} in f32 -> single VPU multiply.
    h = h * mask_ref[...]
    y = jnp.dot(h.astype(w2_ref.dtype), w2_ref[...],
                preferred_element_type=jnp.float32)
    y = y + b2_ref[...]
    o_ref[...] = y.astype(o_ref.dtype)


# --------------------------------------------------------------------------
# Wrapper
# --------------------------------------------------------------------------
def _dropout_mask(key, shape, dropout_p):
    """{0, 1/(1-p)} float32 mask, matching nn.Dropout in distribution."""
    keep = jax.random.bernoulli(key, 1.0 - dropout_p, shape)
    return jnp.where(keep, jnp.float32(1.0 / (1.0 - dropout_p)),
                     jnp.float32(0.0))


def mlp_forward(x, w1, b1, w2, b2, *, dropout_p=0.2, training=False,
                dropout_rng=None, block_b=256, compute_dtype=jnp.float32):
    """x: (B, D1); w1: (D1, H); b1: (H,); w2: (H, H); b2: (H,)."""
    B, D1 = x.shape
    H = w1.shape[1]

    LANE = 128
    Hp = _round_up(max(H, LANE), LANE)        # lane-dense feature dim
    TB = min(block_b, _round_up(B, 8))        # batch tile (sublane multiple)
    Bp = _round_up(B, TB)                     # pad batch to a whole # of tiles
    grid = (Bp // TB,)

    # Zero-pad features to Hp and batch to Bp (exact math, sliced back below).
    xp = jnp.zeros((Bp, D1), jnp.float32).at[:B].set(x).astype(compute_dtype)
    w1p = jnp.zeros((D1, Hp), jnp.float32).at[:, :H].set(w1).astype(compute_dtype)
    w2p = jnp.zeros((Hp, Hp), jnp.float32).at[:H, :H].set(w2).astype(compute_dtype)
    b1p = jnp.zeros((1, Hp), jnp.float32).at[0, :H].set(b1)
    b2p = jnp.zeros((1, Hp), jnp.float32).at[0, :H].set(b2)

    # Streaming (batch-tiled) inputs/outputs.  Weights/biases use a constant
    # index_map so they are DMA'd once and stay resident in VMEM.
    x_spec = pl.BlockSpec((TB, D1), lambda i: (i, 0))
    w1_spec = pl.BlockSpec((D1, Hp), lambda i: (0, 0))
    b1_spec = pl.BlockSpec((1, Hp), lambda i: (0, 0))
    w2_spec = pl.BlockSpec((Hp, Hp), lambda i: (0, 0))
    b2_spec = pl.BlockSpec((1, Hp), lambda i: (0, 0))
    out_spec = pl.BlockSpec((TB, Hp), lambda i: (i, 0))
    # NOTE: once the grid over B is large, pipeline_mode=pl.Buffered(3) on
    # x_spec can hide more DMA latency; left at the default double buffer.

    use_dropout = training and dropout_p > 0.0
    if use_dropout:
        if dropout_rng is None:
            dropout_rng = jax.random.PRNGKey(0)
        mask = _dropout_mask(dropout_rng, (Bp, Hp), dropout_p)
        kernel = _mlp_train_kernel
        in_specs = [x_spec, pl.BlockSpec((TB, Hp), lambda i: (i, 0)),
                    w1_spec, b1_spec, w2_spec, b2_spec]
        args = (xp, mask, w1p, b1p, w2p, b2p)
    else:
        kernel = _mlp_eval_kernel
        in_specs = [x_spec, w1_spec, b1_spec, w2_spec, b2_spec]
        args = (xp, w1p, b1p, w2p, b2p)

    out = pl.pallas_call(
        kernel,
        out_shape=jax.ShapeDtypeStruct((Bp, Hp), jnp.float32),
        grid=grid,
        in_specs=in_specs,
        out_specs=out_spec,
        compiler_params=pltpu.CompilerParams(
            dimension_semantics=("parallel",)),
    )(*args)

    return out[:B, :H]


# --------------------------------------------------------------------------
# Params + self-test
# --------------------------------------------------------------------------
def init_params(key, in_features, out_dim):
    """Deterministic init matching nn.Linear shapes (weights stored transposed)."""
    k1, k2, k3, k4 = jax.random.split(key, 4)
    lim1 = 1.0 / jnp.sqrt(in_features)
    lim2 = 1.0 / jnp.sqrt(out_dim)
    w1 = jax.random.uniform(k1, (in_features, out_dim), jnp.float32, -lim1, lim1)
    b1 = jax.random.uniform(k2, (out_dim,), jnp.float32, -lim1, lim1)
    w2 = jax.random.uniform(k3, (out_dim, out_dim), jnp.float32, -lim2, lim2)
    b2 = jax.random.uniform(k4, (out_dim,), jnp.float32, -lim2, lim2)
    return w1, b1, w2, b2


if __name__ == "__main__":
    # Small shapes consistent with the module: in_dim=16 -> in_features=256.
    in_dim, out_dim = 16, 32
    in_features = in_dim * in_dim

    key = jax.random.PRNGKey(0)
    kx, kp, kd, kx2 = jax.random.split(key, 4)
    w1, b1, w2, b2 = init_params(kp, in_features, out_dim)

    # --- eval path, small batch -------------------------------------------
    batch = 8
    x = jax.random.normal(kx, (batch, in_features), dtype=jnp.float32)
    out = jax.block_until_ready(
        mlp_forward(x, w1, b1, w2, b2, dropout_p=0.2, training=False))
    ref = (x @ w1 + b1) @ w2 + b2
    assert out.shape == (batch, out_dim)
    assert jnp.allclose(out, ref, atol=1e-2, rtol=1e-2), "eval mismatch"

    # --- eval path, larger batch: exercises the batch grid + tail padding --
    big_b = 500
    xb = jax.random.normal(kx2, (big_b, in_features), dtype=jnp.float32)
    outb = jax.block_until_ready(
        mlp_forward(xb, w1, b1, w2, b2, training=False, block_b=256))
    refb = (xb @ w1 + b1) @ w2 + b2
    assert outb.shape == (big_b, out_dim)
    assert jnp.allclose(outb, refb, atol=1e-2, rtol=1e-2), "batched eval mismatch"

    # --- bf16-MXU path (v6e/v7x recommendation), f32 accumulation ----------
    out_bf = jax.block_until_ready(
        mlp_forward(x, w1, b1, w2, b2, training=False,
                    compute_dtype=jnp.bfloat16))
    assert jnp.allclose(out_bf, ref, atol=5e-2, rtol=5e-2), "bf16 eval mismatch"

    # --- training path: dropout mask built host-side, applied in-kernel ----
    out_tr = jax.block_until_ready(
        mlp_forward(x, w1, b1, w2, b2, dropout_p=0.2, training=True,
                    dropout_rng=kd))
    TB = min(256, _round_up(batch, 8))
    Bp = _round_up(batch, TB)
    Hp = _round_up(max(out_dim, 128), 128)
    mask = _dropout_mask(kd, (Bp, Hp), 0.2)[:batch, :out_dim]
    ref_tr = ((x @ w1 + b1) * mask) @ w2 + b2
    assert out_tr.shape == (batch, out_dim)
    assert jnp.allclose(out_tr, ref_tr, atol=1e-2, rtol=1e-2), "train mismatch"

    print("KERNEL_OK")
</pallas_src>

<mosaic_0001>
module attributes {stable_mosaic.version = 11 : i64} {
  func.func @_mlp_eval_kernel(%arg0: i32, %arg1: memref<8x256xf32, #tpu.memory_space<vmem>>, %arg2: memref<256x128xf32, #tpu.memory_space<vmem>>, %arg3: memref<1x128xf32, #tpu.memory_space<vmem>>, %arg4: memref<128x128xf32, #tpu.memory_space<vmem>>, %arg5: memref<1x128xf32, #tpu.memory_space<vmem>>, %arg6: memref<8x128xf32, #tpu.memory_space<vmem>>) attributes {dimension_semantics = [#tpu.dimension_semantics<parallel>], iteration_bounds = array<i64: 1>, scalar_prefetch = 0 : i64, scratch_operands = 0 : i64, tpu.core_type = #tpu.core_type<tc>, window_params = [{transform_indices = @transform_0, window_bounds = array<i64: 8, 256>}, {pipeline_mode = #tpu.pipeline_mode<synchronous>, transform_indices = @transform_1, window_bounds = array<i64: 256, 128>}, {pipeline_mode = #tpu.pipeline_mode<synchronous>, transform_indices = @transform_2, window_bounds = array<i64: 1, 128>}, {pipeline_mode = #tpu.pipeline_mode<synchronous>, transform_indices = @transform_3, window_bounds = array<i64: 128, 128>}, {pipeline_mode = #tpu.pipeline_mode<synchronous>, transform_indices = @transform_4, window_bounds = array<i64: 1, 128>}, {transform_indices = @transform_5, window_bounds = array<i64: 8, 128>}]} {
    %c0 = arith.constant 0 : index
    %c0_0 = arith.constant 0 : index
    %0 = vector.load %arg1[%c0, %c0_0] : memref<8x256xf32, #tpu.memory_space<vmem>>, vector<8x256xf32>
    %c0_1 = arith.constant 0 : index
    %c0_2 = arith.constant 0 : index
    %1 = vector.load %arg2[%c0_1, %c0_2] : memref<256x128xf32, #tpu.memory_space<vmem>>, vector<256x128xf32>
    %cst = arith.constant dense<0.000000e+00> : vector<8x128xf32>
    %2 = tpu.matmul %0, %1, %cst {dimension_numbers = #tpu.dot_dimension_numbers<[1], [0], [0], [1], [0, 0, 1, 1], [], []>} : vector<8x256xf32>, vector<256x128xf32>, vector<8x128xf32> -> vector<8x128xf32>
    %c0_3 = arith.constant 0 : index
    %c0_4 = arith.constant 0 : index
    %3 = vector.load %arg3[%c0_3, %c0_4] : memref<1x128xf32, #tpu.memory_space<vmem>>, vector<1x128xf32>
    %4 = vector.broadcast %3 : vector<1x128xf32> to vector<8x128xf32>
    %5 = arith.addf %2, %4 : vector<8x128xf32>
    %c0_5 = arith.constant 0 : index
    %c0_6 = arith.constant 0 : index
    %6 = vector.load %arg4[%c0_5, %c0_6] : memref<128x128xf32, #tpu.memory_space<vmem>>, vector<128x128xf32>
    %cst_7 = arith.constant dense<0.000000e+00> : vector<8x128xf32>
    %7 = tpu.matmul %5, %6, %cst_7 {dimension_numbers = #tpu.dot_dimension_numbers<[1], [0], [0], [1], [0, 0, 1, 1], [], []>} : vector<8x128xf32>, vector<128x128xf32>, vector<8x128xf32> -> vector<8x128xf32>
    %c0_8 = arith.constant 0 : index
    %c0_9 = arith.constant 0 : index
    %8 = vector.load %arg5[%c0_8, %c0_9] : memref<1x128xf32, #tpu.memory_space<vmem>>, vector<1x128xf32>
    %9 = vector.broadcast %8 : vector<1x128xf32> to vector<8x128xf32>
    %10 = arith.addf %7, %9 : vector<8x128xf32>
    %c0_10 = arith.constant 0 : index
    %c0_11 = arith.constant 0 : index
    %11 = vector.load %arg6[%c0_10, %c0_11] : memref<8x128xf32, #tpu.memory_space<vmem>>, vector<8x128xf32>
    tpu.vector_store %arg6[%c0_10, %c0_11], %10 {strides = array<i32>} : memref<8x128xf32, #tpu.memory_space<vmem>>, vector<8x128xf32>,
    return
  }
  func.func @transform_0(%arg0: i32) -> (i32, i32) {
    %c0_i32 = arith.constant 0 : i32
    %c0_i32_0 = arith.constant 0 : i32
    return %arg0, %c0_i32 : i32, i32
  }
  func.func @transform_1(%arg0: i32) -> (i32, i32) {
    %c0_i32 = arith.constant 0 : i32
    %c0_i32_0 = arith.constant 0 : i32
    %c0_i32_1 = arith.constant 0 : i32
    return %c0_i32, %c0_i32_0 : i32, i32
  }
  func.func @transform_2(%arg0: i32) -> (i32, i32) {
    %c0_i32 = arith.constant 0 : i32
    %c0_i32_0 = arith.constant 0 : i32
    %c0_i32_1 = arith.constant 0 : i32
    return %c0_i32, %c0_i32_0 : i32, i32
  }
  func.func @transform_3(%arg0: i32) -> (i32, i32) {
    %c0_i32 = arith.constant 0 : i32
    %c0_i32_0 = arith.constant 0 : i32
    %c0_i32_1 = arith.constant 0 : i32
    return %c0_i32, %c0_i32_0 : i32, i32
  }
  func.func @transform_4(%arg0: i32) -> (i32, i32) {
    %c0_i32 = arith.constant 0 : i32
    %c0_i32_0 = arith.constant 0 : i32
    %c0_i32_1 = arith.constant 0 : i32
    return %c0_i32, %c0_i32_0 : i32, i32
  }
  func.func @transform_5(%arg0: i32) -> (i32, i32) {
    %c0_i32 = arith.constant 0 : i32
    %c0_i32_0 = arith.constant 0 : i32
    return %arg0, %c0_i32 : i32, i32
  }
}

</mosaic_0001>

<llo_original>
// kernel: tpu_custom_call.1
$region0: #{tpu_custom_call.1}
  #allocation0 [shape = 'u32[]', space=smem, size = 0x4, offset = 0x4, fixed_abs, tag = 'smem constant byte address 0x4 - core index']
  #allocation1 [shape = 'u32[144,128]{1,0:T(1,128)}', space=vmem, size = 0x12000, scoped, tag = 'internal scratch']
  %s0 = inlined_call_operand.hbm [shape: f32[8,256], index: 0, kind: input, shape index: {}]
  %s1 = inlined_call_operand.hbm [shape: f32[256,128], index: 1, kind: input, shape index: {}]
  %s2 = inlined_call_operand.vmem [shape: f32[1,128], index: 2, kind: input, shape index: {}]
  %s3 = inlined_call_operand.hbm [shape: f32[128,128], index: 3, kind: input, shape index: {}]
  %s4 = inlined_call_operand.vmem [shape: f32[1,128], index: 4, kind: input, shape index: {}]
  %s5 = inlined_call_operand.hbm [shape: f32[8,128], index: 5, kind: output, shape index: {}]
  %s6 = sld [smem:[#allocation0]]
  $region42: #{tpu_custom_call.1} parent=0
    _
  %s8 = ssub.s32 1, %s6
  %s9 = scalar_select 0, %s8, %s6
  $region1: #{tpu_custom_call.1} parent=0
    #allocation2 [shape = 'u8[8192]{0}', space=vmem, size = 0x2000, scoped, tag = 'input window, operand 0, single buffered']
    #allocation3 [shape = 's32[1]{0}', space=sflag, size = 0x4, scoped, tag = 'scoped memory for tpu_custom_call.1']
    #allocation4 [shape = 's32[1]{0}', space=sflag, size = 0x4, scoped, tag = 'scoped memory for tpu_custom_call.1']
    #allocation5 [shape = 'u8[131072]{0}', space=vmem, size = 0x20000, scoped, tag = 'input window, operand 1, single buffered']
    #allocation6 [shape = 's32[1]{0}', space=sflag, size = 0x4, scoped, tag = 'scoped memory for tpu_custom_call.1']
    #allocation7 [shape = 'u8[65536]{0}', space=vmem, size = 0x10000, scoped, tag = 'input window, operand 3, single buffered']
    #allocation8 [shape = 'u8[4096]{0}', space=vmem, size = 0x1000, scoped, tag = 'output window, operand 0, single buffered']
    %10 = vsyncpa [#allocation3], 0
    %11 = vsyncpa [#allocation6], 0
    %12 = vsyncpa [#allocation4], 0
    // Predicated region
    $region2: #{tpu_custom_call.1} parent=1 // pred_check
      _
    $region3: #{tpu_custom_call.1} parent=1 // pred_check_branch
      %14 = sbr.rel (0) target = $region5
    $region4: #{tpu_custom_call.1} parent=1 // pred_region
      %s16 = ssub.s32 256, 256
      %17 = vsyncadd [#allocation3], %s16
      %s19 = sshll.u32 [#allocation2], 4
      %s20 = int_to_ptr.vmem [resolvable:$true] %s19
      %22 = dma.hbm_to_vmem [thread:$0]  %s0, 256, %s20, [#allocation3]
    $region5: #{tpu_custom_call.1} parent=1 // pred_fallthru
      _
    // Predicated region
    $region6: #{tpu_custom_call.1} parent=1 // pred_check
      _
    $region7: #{tpu_custom_call.1} parent=1 // pred_check_branch
      %24 = sbr.rel (0) target = $region9
    $region8: #{tpu_custom_call.1} parent=1 // pred_region
      %s26 = ssub.s32 4096, 4096
      %27 = vsyncadd [#allocation6], %s26
      %s28 = sshll.u32 [#allocation5], 4
      %s29 = int_to_ptr.vmem [resolvable:$true] %s28
      %34 = dma.hbm_to_vmem [thread:$0]  %s1, 4096, %s29, [#allocation6], 128, 128, 8
    $region9: #{tpu_custom_call.1} parent=1 // pred_fallthru
      _
    // Predicated region
    $region10: #{tpu_custom_call.1} parent=1 // pred_check
      _
    $region11: #{tpu_custom_call.1} parent=1 // pred_check_branch
      %36 = sbr.rel (0) target = $region13
    $region12: #{tpu_custom_call.1} parent=1 // pred_region
      _
    $region13: #{tpu_custom_call.1} parent=1 // pred_fallthru
      _
    // Predicated region
    $region14: #{tpu_custom_call.1} parent=1 // pred_check
      _
    $region15: #{tpu_custom_call.1} parent=1 // pred_check_branch
      %38 = sbr.rel (0) target = $region17
    $region16: #{tpu_custom_call.1} parent=1 // pred_region
      %s40 = ssub.s32 2048, 2048
      %41 = vsyncadd [#allocation6], %s40
      %s42 = sshll.u32 [#allocation7], 4
      %s43 = int_to_ptr.vmem [resolvable:$true] %s42
      %48 = dma.hbm_to_vmem [thread:$0]  %s3, 2048, %s43, [#allocation6], 128, 128, 8
    $region17: #{tpu_custom_call.1} parent=1 // pred_fallthru
      _
    // Predicated region
    $region18: #{tpu_custom_call.1} parent=1 // pred_check
      _
    $region19: #{tpu_custom_call.1} parent=1 // pred_check_branch
      %50 = sbr.rel (0) target = $region21
    $region20: #{tpu_custom_call.1} parent=1 // pred_region
      _
    $region21: #{tpu_custom_call.1} parent=1 // pred_fallthru
      _
    // Predicated region
    $region22: #{tpu_custom_call.1} parent=1 // pred_check
      _
    $region23: #{tpu_custom_call.1} parent=1 // pred_check_branch
      %52 = sbr.rel (0) target = $region25
    $region24: #{tpu_custom_call.1} parent=1 // pred_region
      %53 = dma.done [#allocation3], 256
    $region25: #{tpu_custom_call.1} parent=1 // pred_fallthru
      _
    // Predicated region
    $region26: #{tpu_custom_call.1} parent=1 // pred_check
      _
    $region27: #{tpu_custom_call.1} parent=1 // pred_check_branch
      %55 = sbr.rel (0) target = $region29
    $region28: #{tpu_custom_call.1} parent=1 // pred_region
      %56 = dma.done [#allocation6], 4096
    $region29: #{tpu_custom_call.1} parent=1 // pred_fallthru
      _
    // Predicated region
    $region30: #{tpu_custom_call.1} parent=1 // pred_check
      _
    $region31: #{tpu_custom_call.1} parent=1 // pred_check_branch
      %58 = sbr.rel (0) target = $region33
    $region32: #{tpu_custom_call.1} parent=1 // pred_region
      %59 = dma.done [#allocation6], 2048
    $region33: #{tpu_custom_call.1} parent=1 // pred_fallthru
      _
    %v60 = vld [vmem:[#allocation2] sm:$0xff]
    %v61 = vld [vmem:[#allocation2 + $0x8] sm:$0xff]
    %v62 = vld [vmem:[#allocation5] sm:$0xff]
    %v63 = vld [vmem:[#allocation5 + $0x8] sm:$0xff]
    %v64 = vld [vmem:[#allocation5 + $0x10] sm:$0xff]
    %v65 = vld [vmem:[#allocation5 + $0x18] sm:$0xff]
    %v66 = vld [vmem:[#allocation5 + $0x20] sm:$0xff]
    %v67 = vld [vmem:[#allocation5 + $0x28] sm:$0xff]
    %v68 = vld [vmem:[#allocation5 + $0x30] sm:$0xff]
    %v69 = vld [vmem:[#allocation5 + $0x38] sm:$0xff]
    %v70 = vld [vmem:[#allocation5 + $0x40] sm:$0xff]
    %v71 = vld [vmem:[#allocation5 + $0x48] sm:$0xff]
    %v72 = vld [vmem:[#allocation5 + $0x50] sm:$0xff]
    %v73 = vld [vmem:[#allocation5 + $0x58] sm:$0xff]
    %v74 = vld [vmem:[#allocation5 + $0x60] sm:$0xff]
    %v75 = vld [vmem:[#allocation5 + $0x68] sm:$0xff]
    %v76 = vld [vmem:[#allocation5 + $0x70] sm:$0xff]
    %v77 = vld [vmem:[#allocation5 + $0x78] sm:$0xff]
    %v78 = vld [vmem:[#allocation5 + $0x80] sm:$0xff]
    %v79 = vld [vmem:[#allocation5 + $0x88] sm:$0xff]
    %v80 = vld [vmem:[#allocation5 + $0x90] sm:$0xff]
    %v81 = vld [vmem:[#allocation5 + $0x98] sm:$0xff]
    %v82 = vld [vmem:[#allocation5 + $0xa0] sm:$0xff]
    %v83 = vld [vmem:[#allocation5 + $0xa8] sm:$0xff]
    %v84 = vld [vmem:[#allocation5 + $0xb0] sm:$0xff]
    %v85 = vld [vmem:[#allocation5 + $0xb8] sm:$0xff]
    %v86 = vld [vmem:[#allocation5 + $0xc0] sm:$0xff]
    %v87 = vld [vmem:[#allocation5 + $0xc8] sm:$0xff]
    %v88 = vld [vmem:[#allocation5 + $0xd0] sm:$0xff]
    %v89 = vld [vmem:[#allocation5 + $0xd8] sm:$0xff]
    %v90 = vld [vmem:[#allocation5 + $0xe0] sm:$0xff]
    %v91 = vld [vmem:[#allocation5 + $0xe8] sm:$0xff]
    %v92 = vld [vmem:[#allocation5 + $0xf0] sm:$0xff]
    %v93 = vld [vmem:[#allocation5 + $0xf8] sm:$0xff]
    %v94 = vld [vmem:[%s2] sm:$0x1]
    %v96 = vlaneseq
    %v97 = vshrl.u32 %v96, 7
    %v98 = vsub.s32 0, %v97
    %v99 = vrot.slane %v94, %v98
    %101 = vmatprep.subr.mxu0 0.0
    %102 = vmatpush1.msra.mxu0 %v62
    %103 = vmatprep.subr.mxu0 0.0
    %104 = vmatpush1.msra.mxu0 %v63
    %105 = vmatprep.subr.mxu0 0.0
    %106 = vmatpush1.msra.mxu0 %v64
    %107 = vmatprep.subr.mxu0 0.0
    %108 = vmatpush1.msra.mxu0 %v65
    %109 = vmatprep.subr.mxu0 0.0
    %110 = vmatpush1.msra.mxu0 %v66
    %111 = vmatprep.subr.mxu0 0.0
    %112 = vmatpush1.msra.mxu0 %v67
    %113 = vmatprep.subr.mxu0 0.0
    %114 = vmatpush1.msra.mxu0 %v68
    %115 = vmatprep.subr.mxu0 0.0
    %116 = vmatpush1.msra.mxu0 %v69
    %117 = vmatprep.subr.mxu0 0.0
    %118 = vmatpush1.msra.mxu0 %v70
    %119 = vmatprep.subr.mxu0 0.0
    %120 = vmatpush1.msra.mxu0 %v71
    %121 = vmatprep.subr.mxu0 0.0
    %122 = vmatpush1.msra.mxu0 %v72
    %123 = vmatprep.subr.mxu0 0.0
    %124 = vmatpush1.msra.mxu0 %v73
    %125 = vmatprep.subr.mxu0 0.0
    %126 = vmatpush1.msra.mxu0 %v74
    %127 = vmatprep.subr.mxu0 0.0
    %128 = vmatpush1.msra.mxu0 %v75
    %129 = vmatprep.subr.mxu0 0.0
    %130 = vmatpush1.msra.mxu0 %v76
    %131 = vmatprep.subr.mxu0 0.0
    %132 = vmatpush1.msra.mxu0 %v77
    %133 = vmatprep.subr.mxu0 0.0
    %134 = vmatpush1.msra.mxu0 %v78
    %135 = vmatprep.subr.mxu0 0.0
    %136 = vmatpush1.msra.mxu0 %v79
    %137 = vmatprep.subr.mxu0 0.0
    %138 = vmatpush1.msra.mxu0 %v80
    %139 = vmatprep.subr.mxu0 0.0
    %140 = vmatpush1.msra.mxu0 %v81
    %141 = vmatprep.subr.mxu0 0.0
    %142 = vmatpush1.msra.mxu0 %v82
    %143 = vmatprep.subr.mxu0 0.0
    %144 = vmatpush1.msra.mxu0 %v83
    %145 = vmatprep.subr.mxu0 0.0
    %146 = vmatpush1.msra.mxu0 %v84
    %147 = vmatprep.subr.mxu0 0.0
    %148 = vmatpush1.msra.mxu0 %v85
    %149 = vmatprep.subr.mxu0 0.0
    %150 = vmatpush1.msra.mxu0 %v86
    %151 = vmatprep.subr.mxu0 0.0
    %152 = vmatpush1.msra.mxu0 %v87
    %153 = vmatprep.subr.mxu0 0.0
    %154 = vmatpush1.msra.mxu0 %v88
    %155 = vmatprep.subr.mxu0 0.0
    %156 = vmatpush1.msra.mxu0 %v89
    %157 = vmatprep.subr.mxu0 0.0
    %158 = vmatpush1.msra.mxu0 %v90
    %159 = vmatprep.subr.mxu0 0.0
    %160 = vmatpush1.msra.mxu0 %v91
    %161 = vmatprep.subr.mxu0 0.0
    %162 = vmatpush1.msra.mxu0 %v92
    %163 = vmatprep.subr.mxu0 0.0
    %164 = vmatpush1.msra.mxu0 %v93
    %165 = vmatprep.mubr.f32.mxu0 %v61
    %166 = vmatmul.mubr.f32.gmra.mrb[0].mxu0 %v60
    %v167 = vpop.f32.mrb[0].mxu0
    %v168 = vadd.f32 %v99, %v167
    %v169 = vpop.f32.mrb[0].mxu0
    %170 = vdwg.mxu0
    %v171 = vld [vmem:[#allocation7] sm:$0xff]
    %v172 = vld [vmem:[#allocation7 + $0x8] sm:$0xff]
    %v173 = vld [vmem:[#allocation7 + $0x10] sm:$0xff]
    %v174 = vld [vmem:[#allocation7 + $0x18] sm:$0xff]
    %v175 = vld [vmem:[#allocation7 + $0x20] sm:$0xff]
    %v176 = vld [vmem:[#allocation7 + $0x28] sm:$0xff]
    %v177 = vld [vmem:[#allocation7 + $0x30] sm:$0xff]
    %v178 = vld [vmem:[#allocation7 + $0x38] sm:$0xff]
    %v179 = vld [vmem:[#allocation7 + $0x40] sm:$0xff]
    %v180 = vld [vmem:[#allocation7 + $0x48] sm:$0xff]
    %v181 = vld [vmem:[#allocation7 + $0x50] sm:$0xff]
    %v182 = vld [vmem:[#allocation7 + $0x58] sm:$0xff]
    %v183 = vld [vmem:[#allocation7 + $0x60] sm:$0xff]
    %v184 = vld [vmem:[#allocation7 + $0x68] sm:$0xff]
    %v185 = vld [vmem:[#allocation7 + $0x70] sm:$0xff]
    %v186 = vld [vmem:[#allocation7 + $0x78] sm:$0xff]
    %v187 = vld [vmem:[%s4] sm:$0x1]
    %v189 = vlaneseq
    %v190 = vshrl.u32 %v189, 7
    %v191 = vsub.s32 0, %v190
    %v192 = vrot.slane %v187, %v191
    %194 = vmatprep.subr.mxu0 0.0
    %195 = vmatpush1.msra.mxu0 %v171
    %196 = vmatprep.subr.mxu0 0.0
    %197 = vmatpush1.msra.mxu0 %v172
    %198 = vmatprep.subr.mxu0 0.0
    %199 = vmatpush1.msra.mxu0 %v173
    %200 = vmatprep.subr.mxu0 0.0
    %201 = vmatpush1.msra.mxu0 %v174
    %202 = vmatprep.subr.mxu0 0.0
    %203 = vmatpush1.msra.mxu0 %v175
    %204 = vmatprep.subr.mxu0 0.0
    %205 = vmatpush1.msra.mxu0 %v176
    %206 = vmatprep.subr.mxu0 0.0
    %207 = vmatpush1.msra.mxu0 %v177
    %208 = vmatprep.subr.mxu0 0.0
    %209 = vmatpush1.msra.mxu0 %v178
    %210 = vmatprep.subr.mxu0 0.0
    %211 = vmatpush1.msra.mxu0 %v179
    %212 = vmatprep.subr.mxu0 0.0
    %213 = vmatpush1.msra.mxu0 %v180
    %214 = vmatprep.subr.mxu0 0.0
    %215 = vmatpush1.msra.mxu0 %v181
    %216 = vmatprep.subr.mxu0 0.0
    %217 = vmatpush1.msra.mxu0 %v182
    %218 = vmatprep.subr.mxu0 0.0
    %219 = vmatpush1.msra.mxu0 %v183
    %220 = vmatprep.subr.mxu0 0.0
    %221 = vmatpush1.msra.mxu0 %v184
    %222 = vmatprep.subr.mxu0 0.0
    %223 = vmatpush1.msra.mxu0 %v185
    %224 = vmatprep.subr.mxu0 0.0
    %225 = vmatpush1.msra.mxu0 %v186
    %226 = vmatprep.subr.mxu0 0.0
    %227 = vmatpush1.msra.mxu0 0.0
    %228 = vmatprep.subr.mxu0 0.0
    %229 = vmatpush1.msra.mxu0 0.0
    %230 = vmatprep.subr.mxu0 0.0
    %231 = vmatpush1.msra.mxu0 0.0
    %232 = vmatprep.subr.mxu0 0.0
    %233 = vmatpush1.msra.mxu0 0.0
    %234 = vmatprep.subr.mxu0 0.0
    %235 = vmatpush1.msra.mxu0 0.0
    %236 = vmatprep.subr.mxu0 0.0
    %237 = vmatpush1.msra.mxu0 0.0
    %238 = vmatprep.subr.mxu0 0.0
    %239 = vmatpush1.msra.mxu0 0.0
    %240 = vmatprep.subr.mxu0 0.0
    %241 = vmatpush1.msra.mxu0 0.0
    %242 = vmatprep.subr.mxu0 0.0
    %243 = vmatpush1.msra.mxu0 0.0
    %244 = vmatprep.subr.mxu0 0.0
    %245 = vmatpush1.msra.mxu0 0.0
    %246 = vmatprep.subr.mxu0 0.0
    %247 = vmatpush1.msra.mxu0 0.0
    %248 = vmatprep.subr.mxu0 0.0
    %249 = vmatpush1.msra.mxu0 0.0
    %250 = vmatprep.subr.mxu0 0.0
    %251 = vmatpush1.msra.mxu0 0.0
    %252 = vmatprep.subr.mxu0 0.0
    %253 = vmatpush1.msra.mxu0 0.0
    %254 = vmatprep.subr.mxu0 0.0
    %255 = vmatpush1.msra.mxu0 0.0
    %256 = vmatprep.subr.mxu0 0.0
    %257 = vmatpush1.msra.mxu0 0.0
    %258 = vmatprep.mubr.f32.mxu0 0.0
    %259 = vmatmul.mubr.f32.gmra.mrb[0].mxu0 %v168
    %v260 = vpop.f32.mrb[0].mxu0
    %v261 = vadd.f32 %v192, %v260
    %v262 = vpop.f32.mrb[0].mxu0
    %263 = vdwg.mxu0
    %264 = vst [vmem:[#allocation8] sm:$0xff] %v261
    // Predicated region
    $region34: #{tpu_custom_call.1} parent=1 // pred_check
      _
    $region35: #{tpu_custom_call.1} parent=1 // pred_check_branch
      %266 = sbr.rel (0) target = $region37
    $region36: #{tpu_custom_call.1} parent=1 // pred_region
      %s268 = ssub.s32 128, 128
      %269 = vsyncadd [#allocation4], %s268
      %s271 = sshll.u32 [#allocation8], 4
      %s272 = int_to_ptr.vmem [resolvable:$true] %s271
      %274 = dma.vmem_to_hbm [thread:$0]  %s272, 128, %s5, [#allocation4]
    $region37: #{tpu_custom_call.1} parent=1 // pred_fallthru
      _
    // Predicated region
    $region38: #{tpu_custom_call.1} parent=1 // pred_check
      _
    $region39: #{tpu_custom_call.1} parent=1 // pred_check_branch
      %276 = sbr.rel (0) target = $region41
    $region40: #{tpu_custom_call.1} parent=1 // pred_region
      %277 = dma.done [#allocation4], 128
    $region41: #{tpu_custom_call.1} parent=1 // pred_fallthru
      _
    %278 = vsyncpa [#allocation3], 1
    %279 = vsyncpa [#allocation6], 1
    %280 = vsyncpa [#allocation4], 1

</llo_original>
